<compile_context>
chip_gen: v7x
topology: tpu7x:2x2x1
jax: 0.10.0
libtpu: 0.0.40
codegen_flags: <defaults>
</compile_context>

<pallas_src>
import functools

import jax
import jax.numpy as jnp
from jax.experimental import pallas as pl
from jax.experimental.pallas import tpu as pltpu

_MIB = 1024 * 1024


def _preprocess_kernel(w_ref, b_ref, x_ref, o_ref):
    """1x1 conv (3->3 channels) + bias on one (tB, 3, tH, W) NCHW tile.

    w_ref: (3, 3) float32 in SMEM   (W[c_out, c_in], the 1x1 conv kernel)
    b_ref: (3,)   float32 in SMEM   (bias[c_out])
    x_ref: (tB, 3, tH, W) VMEM tile (any real dtype; cast to f32 in-kernel)
    o_ref: (tB, 3, tH, W) VMEM tile (out dtype, default bf16)
    """
    x0 = x_ref[:, 0, :, :].astype(jnp.float32)
    x1 = x_ref[:, 1, :, :].astype(jnp.float32)
    x2 = x_ref[:, 2, :, :].astype(jnp.float32)
    # 3 output channels, fully unrolled: out[co] = sum_ci W[co,ci]*x[ci] + b[co]
    # VPU-only; the binding resource is HBM DMA, not any VLIW slot.
    for co in range(3):
        o_ref[:, co, :, :] = (
            w_ref[co, 0] * x0
            + w_ref[co, 1] * x1
            + w_ref[co, 2] * x2
            + b_ref[co]
        ).astype(o_ref.dtype)


def make_preprocess_params(mean_value, std_value, bgr2rgb=False):
    """Build the (3,3) 1x1-conv weight and (3,) bias exactly as the PyTorch
    module's __init__ does (deterministic, no checkpoint load)."""
    if isinstance(mean_value, (int, float)):
        mean_value = [mean_value] * 3
    if isinstance(std_value, (int, float)):
        std_value = [std_value] * 3
    assert len(mean_value) == 3, "mean_value must be a scalar or a 3-element list"
    assert len(std_value) == 3, "std_value must be a scalar or a 3-element list"

    w = jnp.zeros((3, 3), dtype=jnp.float32)
    if not bgr2rgb:
        w = w.at[0, 0].set(1.0 / std_value[0])
        w = w.at[1, 1].set(1.0 / std_value[1])
        w = w.at[2, 2].set(1.0 / std_value[2])
    else:
        w = w.at[0, 2].set(1.0 / std_value[0])
        w = w.at[1, 1].set(1.0 / std_value[1])
        w = w.at[2, 0].set(1.0 / std_value[2])

    b = jnp.array(
        [
            -mean_value[0] / std_value[0],
            -mean_value[1] / std_value[1],
            -mean_value[2] / std_value[2],
        ],
        dtype=jnp.float32,
    )
    return w, b


def _sublane_pack(itemsize):
    """Sublane packing factor: 8 rows/vreg for 4-byte, 16 for 2-byte, 32 for 1-byte."""
    return max(8, 32 // max(itemsize, 1))


def _default_block_target_and_vmem_limit():
    """Generation-aware per-step block target (in+out bytes) and VMEM limit.

    v7x   (64 MiB VMEM/TC, ~3.2 TB/s): ~8 MiB blocks, 40 MiB scoped VMEM.
    v5e/v6e (128 MiB VMEM)           : ~4 MiB blocks, 64 MiB scoped VMEM
    (v5e saturates its ~0.8 TB/s HBM well before 4 MiB; larger is harmless,
     and the explicit limit is required since v5e's scoped default is 16 MiB).
    """
    vmem_bytes = 128 * _MIB
    try:
        vmem_bytes = pltpu.get_tpu_info().vmem_capacity_bytes
    except Exception:
        pass  # fall back to v5e/v6e-like sizing
    if vmem_bytes <= 96 * _MIB:  # v7x-class TensorCore (64 MiB VMEM)
        return 8 * _MIB, 40 * _MIB
    return 4 * _MIB, 64 * _MIB


def _choose_tiles(B, H, W, in_itemsize, out_itemsize, target_block_bytes):
    """Pick (tB, tH) for blocks of shape (tB, 3, tH, W).

    Sized by the *sum* of in+out itemsizes (per-step transfer time is then
    dtype-mix independent) and by the lane-padded width (so the budget bounds
    the VMEM footprint, not just HBM traffic).  tH is a multiple of the dtype
    sublane packing (or full H).  A minimum-steps rule keeps the grid deep
    enough to double-buffer DMAs and feed both v7x TensorCores.
    """
    w_padded = pl.cdiv(W, 128) * 128
    per_row = 3 * w_padded * (in_itemsize + out_itemsize)
    pack = max(_sublane_pack(in_itemsize), _sublane_pack(out_itemsize))
    image_bytes = H * per_row
    total_bytes = B * image_bytes

    if B > 1 and 2 * image_bytes <= target_block_bytes:
        # Small images: pack several per grid step to amortize the ~0.35 us
        # fixed per-step cost.
        tB = max(1, min(B, target_block_bytes // max(image_bytes, 1)))
        tH = H
    else:
        tB = 1
        tH = (target_block_bytes // max(per_row, 1)) // pack * pack
        tH = max(tH, pack)
        if tH >= H:
            tH = H

    # Only enforce a deep grid when there is enough work to split.
    min_steps = min(8, max(1, total_bytes // (512 * 1024)))

    def n_steps(tb, th):
        return pl.cdiv(B, tb) * pl.cdiv(H, th)

    while n_steps(tB, tH) < min_steps:
        if tB > 1:
            tB = (tB + 1) // 2
        elif tH > pack:
            new_th = max(pack, ((tH // 2) // pack) * pack)
            if new_th >= tH:
                break
            tH = new_th
        else:
            break
    return tB, tH


@functools.partial(
    jax.jit,
    static_argnames=("input_module", "out_dtype", "input_layout", "target_block_bytes"),
)
def preprocess_conv_layer_forward(
    x,
    weight,
    bias,
    input_module=None,
    out_dtype=jnp.bfloat16,
    input_layout="NHWC",
    target_block_bytes=None,
):
    """Forward pass of preprocess_conv_layer.

    x: image batch, (B, H, W, 3) NHWC (as the PyTorch forward expects) or
       (B, 3, H, W) NCHW with input_layout="NCHW"; any real dtype
       (uint8/bf16/f32 — the cast to f32 happens in-kernel so narrow images
       move fewer HBM bytes).
    Returns input_module(conv1(permute(x))); with input_module=None (identity)
    the output is the NCHW (B, 3, H, W) normalized tensor in `out_dtype`
    (default bfloat16 — output writes dominate traffic on this kernel).
    """
    default_target, vmem_limit = _default_block_target_and_vmem_limit()
    if target_block_bytes is None:
        target_block_bytes = default_target

    if input_layout == "NHWC":
        B, H, W, C = x.shape
        assert C == 3
        # NHWC -> NCHW, kept in the input's *native* dtype (uint8/bf16 images
        # stay narrow).  XLA generally materializes this minor-dim transpose in
        # HBM (one extra read+write of the image); the cheapest deployments
        # ingest NCHW directly (input_layout="NCHW") or fold the (W, b) affine
        # into the first conv of `input_module` and skip this kernel entirely.
        # TODO(synk): fold weight/bias into input_module's first conv when that
        # module is known, eliminating both this kernel and the permute.
        x_nchw = jnp.transpose(x, (0, 3, 1, 2))
    elif input_layout == "NCHW":
        B, C, H, W = x.shape
        assert C == 3
        x_nchw = x
    else:
        raise ValueError(f"input_layout must be 'NHWC' or 'NCHW', got {input_layout!r}")

    in_itemsize = x_nchw.dtype.itemsize
    out_itemsize = jnp.dtype(out_dtype).itemsize
    tB, tH = _choose_tiles(B, H, W, in_itemsize, out_itemsize, target_block_bytes)
    grid = (pl.cdiv(B, tB), pl.cdiv(H, tH))

    n_elems = B * 3 * H * W
    cost = pl.CostEstimate(
        flops=6 * n_elems,  # 3 mul + 3 add per output element
        transcendentals=0,
        bytes_accessed=n_elems * (in_itemsize + out_itemsize),
    )

    # NOTE: for W that is not a multiple of 128 the trailing lane group is
    # padded/masked (vst.msk); HBM bytes are unaffected, so this only matters
    # for very small W (<~256) and is left as-is here.
    out = pl.pallas_call(
        _preprocess_kernel,
        out_shape=jax.ShapeDtypeStruct((B, 3, H, W), out_dtype),
        grid_spec=pltpu.PrefetchScalarGridSpec(
            num_scalar_prefetch=0,
            grid=grid,
            in_specs=[
                pl.BlockSpec(memory_space=pltpu.SMEM),            # weight (3, 3)
                pl.BlockSpec(memory_space=pltpu.SMEM),            # bias   (3,)
                pl.BlockSpec((tB, 3, tH, W), lambda bi, hi: (bi, 0, hi, 0)),
            ],
            out_specs=pl.BlockSpec((tB, 3, tH, W), lambda bi, hi: (bi, 0, hi, 0)),
        ),
        compiler_params=pltpu.CompilerParams(
            # Both grid axes are independent tiles -> megacore may split them.
            dimension_semantics=("parallel", "parallel"),
            # Best-effort only (a minor-dim-changing transpose may not fuse);
            # correctness is unaffected either way.
            allow_input_fusion=[False, False, input_layout == "NHWC"],
            # Explicit budget: ~2x the per-step (in+out) block, generation-aware.
            vmem_limit_bytes=vmem_limit,
        ),
        cost_estimate=cost,
    )(weight, bias, x_nchw)

    # TODO(synk): `input_module` is an arbitrary user-supplied nn.Module in the
    # original code; here it defaults to identity (no generic Pallas equivalent
    # for an opaque submodule).  For a real deployment the affine W/b should be
    # folded into input_module's first conv instead of running this kernel.
    if input_module is not None:
        out = input_module(out)
    return out


if __name__ == "__main__":
    key = jax.random.PRNGKey(0)
    mean_value = [123.675, 116.28, 103.53]
    std_value = [58.395, 57.12, 57.375]
    weight, bias = make_preprocess_params(mean_value, std_value, bgr2rgb=True)

    def reference(x_nhwc):
        x_nchw = jnp.transpose(x_nhwc, (0, 3, 1, 2)).astype(jnp.float32)
        return jnp.einsum("oc,bchw->bohw", weight, x_nchw) + bias[None, :, None, None]

    # --- Test 1: default path (bf16 out), small demo shape, batch-packed ----
    B, H, W = 2, 16, 128
    x = jax.random.uniform(key, (B, H, W, 3), dtype=jnp.float32) * 255.0
    out = jax.block_until_ready(preprocess_conv_layer_forward(x, weight, bias))
    assert out.shape == (B, 3, H, W)
    assert out.dtype == jnp.bfloat16
    assert jnp.allclose(out.astype(jnp.float32), reference(x), atol=2e-2, rtol=1e-2)

    # --- Test 2: f32 out, forced H tiling with a partial tail tile ----------
    B2, H2, W2 = 1, 72, 128
    x2 = jax.random.uniform(
        jax.random.PRNGKey(1), (B2, H2, W2, 3), dtype=jnp.float32) * 255.0
    out2 = jax.block_until_ready(
        preprocess_conv_layer_forward(
            x2, weight, bias, out_dtype=jnp.float32, target_block_bytes=64 * 1024))
    assert out2.shape == (B2, 3, H2, W2)
    assert jnp.allclose(out2, reference(x2), atol=1e-4, rtol=1e-5)

    # --- Test 3: batch tiling of small images (tB > 1) ----------------------
    B3, H3, W3 = 4, 8, 128
    x3 = jax.random.uniform(
        jax.random.PRNGKey(2), (B3, H3, W3, 3), dtype=jnp.float32) * 255.0
    out3 = jax.block_until_ready(
        preprocess_conv_layer_forward(
            x3, weight, bias, out_dtype=jnp.float32, target_block_bytes=64 * 1024))
    assert out3.shape == (B3, 3, H3, W3)
    assert jnp.allclose(out3, reference(x3), atol=1e-4, rtol=1e-5)

    # --- Test 4: NCHW ingestion path (no wrapper permute) with bf16 input ---
    x4 = (jax.random.uniform(
        jax.random.PRNGKey(3), (2, 24, 128, 3), dtype=jnp.float32) * 255.0
    ).astype(jnp.bfloat16)
    x4_nchw = jnp.transpose(x4, (0, 3, 1, 2))
    out4 = jax.block_until_ready(
        preprocess_conv_layer_forward(x4_nchw, weight, bias, input_layout="NCHW"))
    assert out4.shape == (2, 3, 24, 128)
    assert jnp.allclose(out4.astype(jnp.float32), reference(x4), atol=3e-2, rtol=2e-2)

    print("KERNEL_OK")
</pallas_src>

<mosaic_0001>
module attributes {stable_mosaic.version = 11 : i64} {
  func.func @_preprocess_kernel(%arg0: i32, %arg1: i32, %arg2: memref<3x3xf32, #tpu.memory_space<smem>>, %arg3: memref<3xf32, #tpu.memory_space<smem>>, %arg4: memref<2x3x16x128xf32, #tpu.memory_space<vmem>>, %arg5: memref<2x3x16x128xbf16, #tpu.memory_space<vmem>>) attributes {dimension_semantics = [#tpu.dimension_semantics<parallel>, #tpu.dimension_semantics<parallel>], iteration_bounds = array<i64: 1, 1>, scalar_prefetch = 0 : i64, scratch_operands = 0 : i64, tpu.core_type = #tpu.core_type<tc>, window_params = [{transform_indices = @transform_0, window_bounds = array<i64: 3, 3>}, {transform_indices = @transform_1, window_bounds = array<i64: 3>}, {transform_indices = @transform_2, window_bounds = array<i64: 2, 3, 16, 128>}, {transform_indices = @transform_3, window_bounds = array<i64: 2, 3, 16, 128>}]} {
    %c0 = arith.constant 0 : index
    %c0_0 = arith.constant 0 : index
    %c0_1 = arith.constant 0 : index
    %c0_2 = arith.constant 0 : index
    %0 = vector.load %arg4[%c0, %c0_0, %c0_1, %c0_2] : memref<2x3x16x128xf32, #tpu.memory_space<vmem>>, vector<2x1x16x128xf32>
    %1 = vector.shape_cast %0 : vector<2x1x16x128xf32> to vector<2x16x128xf32>
    %c0_3 = arith.constant 0 : index
    %c1 = arith.constant 1 : index
    %c0_4 = arith.constant 0 : index
    %c0_5 = arith.constant 0 : index
    %2 = vector.load %arg4[%c0_3, %c1, %c0_4, %c0_5] : memref<2x3x16x128xf32, #tpu.memory_space<vmem>>, vector<2x1x16x128xf32>
    %3 = vector.shape_cast %2 : vector<2x1x16x128xf32> to vector<2x16x128xf32>
    %c0_6 = arith.constant 0 : index
    %c2 = arith.constant 2 : index
    %c0_7 = arith.constant 0 : index
    %c0_8 = arith.constant 0 : index
    %4 = vector.load %arg4[%c0_6, %c2, %c0_7, %c0_8] : memref<2x3x16x128xf32, #tpu.memory_space<vmem>>, vector<2x1x16x128xf32>
    %5 = vector.shape_cast %4 : vector<2x1x16x128xf32> to vector<2x16x128xf32>
    %c0_9 = arith.constant 0 : index
    %c0_10 = arith.constant 0 : index
    %6 = memref.load %arg2[%c0_9, %c0_10] : memref<3x3xf32, #tpu.memory_space<smem>>
    %7 = vector.broadcast %6 : f32 to vector<2x16x128xf32>
    %8 = arith.mulf %7, %1 : vector<2x16x128xf32>
    %c0_11 = arith.constant 0 : index
    %c1_12 = arith.constant 1 : index
    %9 = memref.load %arg2[%c0_11, %c1_12] : memref<3x3xf32, #tpu.memory_space<smem>>
    %10 = vector.broadcast %9 : f32 to vector<2x16x128xf32>
    %11 = arith.mulf %10, %3 : vector<2x16x128xf32>
    %12 = arith.addf %8, %11 : vector<2x16x128xf32>
    %c0_13 = arith.constant 0 : index
    %c2_14 = arith.constant 2 : index
    %13 = memref.load %arg2[%c0_13, %c2_14] : memref<3x3xf32, #tpu.memory_space<smem>>
    %14 = vector.broadcast %13 : f32 to vector<2x16x128xf32>
    %15 = arith.mulf %14, %5 : vector<2x16x128xf32>
    %16 = arith.addf %12, %15 : vector<2x16x128xf32>
    %c0_15 = arith.constant 0 : index
    %17 = memref.load %arg3[%c0_15] : memref<3xf32, #tpu.memory_space<smem>>
    %18 = vector.broadcast %17 : f32 to vector<2x16x128xf32>
    %19 = arith.addf %16, %18 : vector<2x16x128xf32>
    %20 = arith.truncf %19 : vector<2x16x128xf32> to vector<2x16x128xbf16>
    %c0_16 = arith.constant 0 : index
    %c0_17 = arith.constant 0 : index
    %c0_18 = arith.constant 0 : index
    %c0_19 = arith.constant 0 : index
    %21 = vector.load %arg5[%c0_16, %c0_17, %c0_18, %c0_19] : memref<2x3x16x128xbf16, #tpu.memory_space<vmem>>, vector<2x1x16x128xbf16>
    %22 = vector.shape_cast %21 : vector<2x1x16x128xbf16> to vector<2x16x128xbf16>
    %23 = vector.shape_cast %20 : vector<2x16x128xbf16> to vector<2x1x16x128xbf16>
    tpu.vector_store %arg5[%c0_16, %c0_17, %c0_18, %c0_19], %23 {strides = array<i32>} : memref<2x3x16x128xbf16, #tpu.memory_space<vmem>>, vector<2x1x16x128xbf16>,
    %c1_20 = arith.constant 1 : index
    %c0_21 = arith.constant 0 : index
    %24 = memref.load %arg2[%c1_20, %c0_21] : memref<3x3xf32, #tpu.memory_space<smem>>
    %25 = vector.broadcast %24 : f32 to vector<2x16x128xf32>
    %26 = arith.mulf %25, %1 : vector<2x16x128xf32>
    %c1_22 = arith.constant 1 : index
    %c1_23 = arith.constant 1 : index
    %27 = memref.load %arg2[%c1_22, %c1_23] : memref<3x3xf32, #tpu.memory_space<smem>>
    %28 = vector.broadcast %27 : f32 to vector<2x16x128xf32>
    %29 = arith.mulf %28, %3 : vector<2x16x128xf32>
    %30 = arith.addf %26, %29 : vector<2x16x128xf32>
    %c1_24 = arith.constant 1 : index
    %c2_25 = arith.constant 2 : index
    %31 = memref.load %arg2[%c1_24, %c2_25] : memref<3x3xf32, #tpu.memory_space<smem>>
    %32 = vector.broadcast %31 : f32 to vector<2x16x128xf32>
    %33 = arith.mulf %32, %5 : vector<2x16x128xf32>
    %34 = arith.addf %30, %33 : vector<2x16x128xf32>
    %c1_26 = arith.constant 1 : index
    %35 = memref.load %arg3[%c1_26] : memref<3xf32, #tpu.memory_space<smem>>
    %36 = vector.broadcast %35 : f32 to vector<2x16x128xf32>
    %37 = arith.addf %34, %36 : vector<2x16x128xf32>
    %38 = arith.truncf %37 : vector<2x16x128xf32> to vector<2x16x128xbf16>
    %c0_27 = arith.constant 0 : index
    %c1_28 = arith.constant 1 : index
    %c0_29 = arith.constant 0 : index
    %c0_30 = arith.constant 0 : index
    %39 = vector.load %arg5[%c0_27, %c1_28, %c0_29, %c0_30] : memref<2x3x16x128xbf16, #tpu.memory_space<vmem>>, vector<2x1x16x128xbf16>
    %40 = vector.shape_cast %39 : vector<2x1x16x128xbf16> to vector<2x16x128xbf16>
    %41 = vector.shape_cast %38 : vector<2x16x128xbf16> to vector<2x1x16x128xbf16>
    tpu.vector_store %arg5[%c0_27, %c1_28, %c0_29, %c0_30], %41 {strides = array<i32>} : memref<2x3x16x128xbf16, #tpu.memory_space<vmem>>, vector<2x1x16x128xbf16>,
    %c2_31 = arith.constant 2 : index
    %c0_32 = arith.constant 0 : index
    %42 = memref.load %arg2[%c2_31, %c0_32] : memref<3x3xf32, #tpu.memory_space<smem>>
    %43 = vector.broadcast %42 : f32 to vector<2x16x128xf32>
    %44 = arith.mulf %43, %1 : vector<2x16x128xf32>
    %c2_33 = arith.constant 2 : index
    %c1_34 = arith.constant 1 : index
    %45 = memref.load %arg2[%c2_33, %c1_34] : memref<3x3xf32, #tpu.memory_space<smem>>
    %46 = vector.broadcast %45 : f32 to vector<2x16x128xf32>
    %47 = arith.mulf %46, %3 : vector<2x16x128xf32>
    %48 = arith.addf %44, %47 : vector<2x16x128xf32>
    %c2_35 = arith.constant 2 : index
    %c2_36 = arith.constant 2 : index
    %49 = memref.load %arg2[%c2_35, %c2_36] : memref<3x3xf32, #tpu.memory_space<smem>>
    %50 = vector.broadcast %49 : f32 to vector<2x16x128xf32>
    %51 = arith.mulf %50, %5 : vector<2x16x128xf32>
    %52 = arith.addf %48, %51 : vector<2x16x128xf32>
    %c2_37 = arith.constant 2 : index
    %53 = memref.load %arg3[%c2_37] : memref<3xf32, #tpu.memory_space<smem>>
    %54 = vector.broadcast %53 : f32 to vector<2x16x128xf32>
    %55 = arith.addf %52, %54 : vector<2x16x128xf32>
    %56 = arith.truncf %55 : vector<2x16x128xf32> to vector<2x16x128xbf16>
    %c0_38 = arith.constant 0 : index
    %c2_39 = arith.constant 2 : index
    %c0_40 = arith.constant 0 : index
    %c0_41 = arith.constant 0 : index
    %57 = vector.load %arg5[%c0_38, %c2_39, %c0_40, %c0_41] : memref<2x3x16x128xbf16, #tpu.memory_space<vmem>>, vector<2x1x16x128xbf16>
    %58 = vector.shape_cast %57 : vector<2x1x16x128xbf16> to vector<2x16x128xbf16>
    %59 = vector.shape_cast %56 : vector<2x16x128xbf16> to vector<2x1x16x128xbf16>
    tpu.vector_store %arg5[%c0_38, %c2_39, %c0_40, %c0_41], %59 {strides = array<i32>} : memref<2x3x16x128xbf16, #tpu.memory_space<vmem>>, vector<2x1x16x128xbf16>,
    return
  }
  func.func @transform_0(%arg0: i32, %arg1: i32) -> (i32, i32) {
    %c0_i32 = arith.constant 0 : i32
    %c0_i32_0 = arith.constant 0 : i32
    %c0_i32_1 = arith.constant 0 : i32
    return %c0_i32, %c0_i32_0 : i32, i32
  }
  func.func @transform_1(%arg0: i32, %arg1: i32) -> i32 {
    %c0_i32 = arith.constant 0 : i32
    %c0_i32_0 = arith.constant 0 : i32
    return %c0_i32 : i32
  }
  func.func @transform_2(%arg0: i32, %arg1: i32) -> (i32, i32, i32, i32) {
    %c0_i32 = arith.constant 0 : i32
    %c0_i32_0 = arith.constant 0 : i32
    %c0_i32_1 = arith.constant 0 : i32
    return %arg0, %c0_i32, %arg1, %c0_i32_0 : i32, i32, i32, i32
  }
  func.func @transform_3(%arg0: i32, %arg1: i32) -> (i32, i32, i32, i32) {
    %c0_i32 = arith.constant 0 : i32
    %c0_i32_0 = arith.constant 0 : i32
    %c0_i32_1 = arith.constant 0 : i32
    return %arg0, %c0_i32, %arg1, %c0_i32_0 : i32, i32, i32, i32
  }
}

</mosaic_0001>

<llo_original>
// kernel: preprocess_conv_layer_forward.2
$region0: #{preprocess_conv_layer_forward.2}
  #allocation0 [shape = 'u32[]', space=smem, size = 0x4, offset = 0x4, fixed_abs, tag = 'smem constant byte address 0x4 - core index']
  #allocation1 [shape = 'u32[144,128]{1,0:T(1,128)}', space=vmem, size = 0x12000, scoped, tag = 'internal scratch']
  %s0 = inlined_call_operand.hbm [shape: f32[3,3], index: 0, kind: input, shape index: {}]
  %s1 = inlined_call_operand.vmem [shape: f32[3], index: 1, kind: input, shape index: {}]
  %s2 = inlined_call_operand.vmem [shape: f32[2,16,128,3], index: 2, kind: input, shape index: {}]
  %s3 = inlined_call_operand.hbm [shape: bf16[2,3,16,128], index: 3, kind: output, shape index: {}]
  %s4 = sld [smem:[#allocation0]]
  $region30: #{preprocess_conv_layer_forward.2} parent=0
    _
  %s6 = ssub.s32 1, %s4
  %s7 = scalar_select 0, %s6, %s4
  $region1: #{preprocess_conv_layer_forward.2} parent=0
    #allocation2 [shape = 'u8[2048]{0}', space=smem, size = 0x800, scoped, tag = 'input window, operand 0, single buffered']
    #allocation3 [shape = 's32[1]{0}', space=sflag, size = 0x4, scoped, tag = 'scoped memory for preprocess_conv_layer_forward.2']
    #allocation4 [shape = 's32[1]{0}', space=sflag, size = 0x4, scoped, tag = 'scoped memory for preprocess_conv_layer_forward.2']
    #allocation5 [shape = 's32[1]{0}', space=sflag, size = 0x4, scoped, tag = 'scoped memory for preprocess_conv_layer_forward.2']
    #allocation6 [shape = 'u8[512]{0}', space=smem, size = 0x200, scoped, tag = 'input window, operand 1, single buffered']
    #allocation7 [shape = 'u8[24576]{0}', space=vmem, size = 0x6000, scoped, tag = 'output window, operand 0, single buffered']
    #allocation8 [shape = 'u8[49152]{0}', space=vmem, size = 0xc000, dematerialized = true, scoped, tag = 'FusionAdapter Buffer %fusion.1 = f32[2,3,16,128]{3,2,1,0:T(8,128)} fusion(%param_2.1), kind=kLoop, calls=%fused_computation.1.clone, metadata={op_name="jit(preprocess_conv_layer_forward)/transpose" stack_frame_id=7}']
    %8 = vsyncpa [#allocation4], 0
    %9 = vsyncpa [#allocation5], 0
    %10 = vsyncpa [#allocation3], 0
    // Predicated region
    $region2: #{preprocess_conv_layer_forward.2} parent=1 // pred_check
      _
    $region3: #{preprocess_conv_layer_forward.2} parent=1 // pred_check_branch
      %12 = sbr.rel (0) target = $region5
    $region4: #{preprocess_conv_layer_forward.2} parent=1 // pred_region
      %s14 = ssub.s32 64, 64
      %15 = vsyncadd [#allocation4], %s14
      %18 = dma.hbm_to_smem %s0, 64, [#allocation2], [#allocation4]
    $region5: #{preprocess_conv_layer_forward.2} parent=1 // pred_fallthru
      _
    // Predicated region
    $region6: #{preprocess_conv_layer_forward.2} parent=1 // pred_check
      _
    $region7: #{preprocess_conv_layer_forward.2} parent=1 // pred_check_branch
      %20 = sbr.rel (0) target = $region9
    $region8: #{preprocess_conv_layer_forward.2} parent=1 // pred_region
      %s22 = ssub.s32 16, 16
      %23 = vsyncadd [#allocation5], %s22
      %s25 = sshll.u32 %s1, 4
      %s26 = int_to_ptr.vmem [resolvable:$true] %s25
      %28 = dma.vmem_to_smem %s26, 16, [#allocation6], [#allocation5]
    $region9: #{preprocess_conv_layer_forward.2} parent=1 // pred_fallthru
      _
    // Predicated region
    $region10: #{preprocess_conv_layer_forward.2} parent=1 // pred_check
      _
    $region11: #{preprocess_conv_layer_forward.2} parent=1 // pred_check_branch
      %30 = sbr.rel (0) target = $region13
    $region12: #{preprocess_conv_layer_forward.2} parent=1 // pred_region
      _
    $region13: #{preprocess_conv_layer_forward.2} parent=1 // pred_fallthru
      _
    // Predicated region
    $region14: #{preprocess_conv_layer_forward.2} parent=1 // pred_check
      _
    $region15: #{preprocess_conv_layer_forward.2} parent=1 // pred_check_branch
      %32 = sbr.rel (0) target = $region17
    $region16: #{preprocess_conv_layer_forward.2} parent=1 // pred_region
      %33 = dma.done [#allocation4], 64
    $region17: #{preprocess_conv_layer_forward.2} parent=1 // pred_fallthru
      _
    // Predicated region
    $region18: #{preprocess_conv_layer_forward.2} parent=1 // pred_check
      _
    $region19: #{preprocess_conv_layer_forward.2} parent=1 // pred_check_branch
      %35 = sbr.rel (0) target = $region21
    $region20: #{preprocess_conv_layer_forward.2} parent=1 // pred_region
      %36 = dma.done [#allocation5], 16
    $region21: #{preprocess_conv_layer_forward.2} parent=1 // pred_fallthru
      _
    %37 = sfence
    %v38 = vld [vmem:[%s2] sm:$0xff]
    %40 = vst [vmem:[#allocation8] sm:$0xff] %v38
    %s41 = scalar_lea.vmem %s2, 8
    %v42 = vld [vmem:[%s41] sm:$0xff]
    %s43 = scalar_lea.vmem [#allocation8], 8
    %45 = vst [vmem:[%s43] sm:$0xff] %v42
    %s46 = scalar_lea.vmem %s2, 16
    %v47 = vld [vmem:[%s46] sm:$0xff]
    %s48 = scalar_lea.vmem [#allocation8], 16
    %50 = vst [vmem:[%s48] sm:$0xff] %v47
    %s51 = scalar_lea.vmem %s2, 24
    %v52 = vld [vmem:[%s51] sm:$0xff]
    %s53 = scalar_lea.vmem [#allocation8], 24
    %55 = vst [vmem:[%s53] sm:$0xff] %v52
    %s56 = scalar_lea.vmem %s2, 32
    %v57 = vld [vmem:[%s56] sm:$0xff]
    %s58 = scalar_lea.vmem [#allocation8], 32
    %60 = vst [vmem:[%s58] sm:$0xff] %v57
    %s61 = scalar_lea.vmem %s2, 40
    %v62 = vld [vmem:[%s61] sm:$0xff]
    %s63 = scalar_lea.vmem [#allocation8], 40
    %65 = vst [vmem:[%s63] sm:$0xff] %v62
    %s66 = scalar_lea.vmem %s2, 48
    %v67 = vld [vmem:[%s66] sm:$0xff]
    %s68 = scalar_lea.vmem [#allocation8], 48
    %70 = vst [vmem:[%s68] sm:$0xff] %v67
    %s71 = scalar_lea.vmem %s2, 56
    %v72 = vld [vmem:[%s71] sm:$0xff]
    %s73 = scalar_lea.vmem [#allocation8], 56
    %75 = vst [vmem:[%s73] sm:$0xff] %v72
    %s76 = scalar_lea.vmem %s2, 64
    %v77 = vld [vmem:[%s76] sm:$0xff]
    %s78 = scalar_lea.vmem [#allocation8], 64
    %80 = vst [vmem:[%s78] sm:$0xff] %v77
    %s81 = scalar_lea.vmem %s2, 72
    %v82 = vld [vmem:[%s81] sm:$0xff]
    %s83 = scalar_lea.vmem [#allocation8], 72
    %85 = vst [vmem:[%s83] sm:$0xff] %v82
    %s86 = scalar_lea.vmem %s2, 80
    %v87 = vld [vmem:[%s86] sm:$0xff]
    %s88 = scalar_lea.vmem [#allocation8], 80
    %90 = vst [vmem:[%s88] sm:$0xff] %v87
    %s91 = scalar_lea.vmem %s2, 88
    %v92 = vld [vmem:[%s91] sm:$0xff]
    %s93 = scalar_lea.vmem [#allocation8], 88
    %95 = vst [vmem:[%s93] sm:$0xff] %v92
    %v96 = vld [vmem:[#allocation8] sm:$0xff]
    %v97 = vld [vmem:[#allocation8 + $0x8] sm:$0xff]
    %v98 = vld [vmem:[#allocation8 + $0x30] sm:$0xff]
    %v99 = vld [vmem:[#allocation8 + $0x38] sm:$0xff]
    %s100 = scalar_lea.vmem [#allocation8], 16
    %v101 = vld [vmem:[%s100] sm:$0xff]
    %v102 = vld [vmem:[%s100 + $0x8] sm:$0xff]
    %v103 = vld [vmem:[%s100 + $0x30] sm:$0xff]
    %v104 = vld [vmem:[%s100 + $0x38] sm:$0xff]
    %s105 = scalar_lea.vmem [#allocation8], 32
    %v106 = vld [vmem:[%s105] sm:$0xff]
    %v107 = vld [vmem:[%s105 + $0x8] sm:$0xff]
    %v108 = vld [vmem:[%s105 + $0x30] sm:$0xff]
    %v109 = vld [vmem:[%s105 + $0x38] sm:$0xff]
    %s110 = sld [smem:[#allocation2]]
    %v111 = vstv %s110
    %v112 = vmul.f32 %v111, %v96
    %v113 = vmul.f32 %v111, %v97
    %v114 = vmul.f32 %v111, %v98
    %v115 = vmul.f32 %v111, %v99
    %s116 = sld [smem:[#allocation2 + $0x1]]
    %v117 = vstv %s116
    %v118 = vmul.f32 %v117, %v101
    %v119 = vmul.f32 %v117, %v102
    %v120 = vmul.f32 %v117, %v103
    %v121 = vmul.f32 %v117, %v104
    %v122 = vadd.f32 %v112, %v118
    %v123 = vadd.f32 %v113, %v119
    %v124 = vadd.f32 %v114, %v120
    %v125 = vadd.f32 %v115, %v121
    %s126 = sld [smem:[#allocation2 + $0x2]]
    %v127 = vstv %s126
    %v128 = vmul.f32 %v127, %v106
    %v129 = vmul.f32 %v127, %v107
    %v130 = vmul.f32 %v127, %v108
    %v131 = vmul.f32 %v127, %v109
    %v132 = vadd.f32 %v122, %v128
    %v133 = vadd.f32 %v123, %v129
    %v134 = vadd.f32 %v124, %v130
    %v135 = vadd.f32 %v125, %v131
    %s136 = sld [smem:[#allocation6]]
    %v137 = vstv %s136
    %v138 = vadd.f32 %v132, %v137
    %v139 = vadd.f32 %v133, %v137
    %v140 = vadd.f32 %v134, %v137
    %v141 = vadd.f32 %v135, %v137
    %v142 = vpack.c.bf16 %v139, %v138
    %v143 = vpack.c.bf16 %v141, %v140
    %v146 = vunpack.c.l.b16 %v142
    %v147 = vunpack.c.h.b16 %v142
    %v148 = vunpack.c.l.b16 %v143
    %v149 = vunpack.c.h.b16 %v143
    %v150 = vpack.c.b16 %v146, %v146
    %v151 = vpack.c.b16 %v147, %v147
    %v152 = vpack.c.b16 %v148, %v148
    %v153 = vpack.c.b16 %v149, %v149
    %158 = vst [vmem:[#allocation7] sm:$0xf] %v150
    %159 = vst [vmem:[#allocation7 + $0x4] sm:$0xf] %v151
    %160 = vst [vmem:[#allocation7 + $0x18] sm:$0xf] %v152
    %161 = vst [vmem:[#allocation7 + $0x1c] sm:$0xf] %v153
    %s162 = sld [smem:[#allocation2 + $0x80]]
    %v163 = vstv %s162
    %v164 = vmul.f32 %v163, %v96
    %v165 = vmul.f32 %v163, %v97
    %v166 = vmul.f32 %v163, %v98
    %v167 = vmul.f32 %v163, %v99
    %s168 = sld [smem:[#allocation2 + $0x81]]
    %v169 = vstv %s168
    %v170 = vmul.f32 %v169, %v101
    %v171 = vmul.f32 %v169, %v102
    %v172 = vmul.f32 %v169, %v103
    %v173 = vmul.f32 %v169, %v104
    %v174 = vadd.f32 %v164, %v170
    %v175 = vadd.f32 %v165, %v171
    %v176 = vadd.f32 %v166, %v172
    %v177 = vadd.f32 %v167, %v173
    %s178 = sld [smem:[#allocation2 + $0x82]]
    %v179 = vstv %s178
    %v180 = vmul.f32 %v179, %v106
    %v181 = vmul.f32 %v179, %v107
    %v182 = vmul.f32 %v179, %v108
    %v183 = vmul.f32 %v179, %v109
    %v184 = vadd.f32 %v174, %v180
    %v185 = vadd.f32 %v175, %v181
    %v186 = vadd.f32 %v176, %v182
    %v187 = vadd.f32 %v177, %v183
    %s188 = sld [smem:[#allocation6 + $0x1]]
    %v189 = vstv %s188
    %v190 = vadd.f32 %v184, %v189
    %v191 = vadd.f32 %v185, %v189
    %v192 = vadd.f32 %v186, %v189
    %v193 = vadd.f32 %v187, %v189
    %v194 = vpack.c.bf16 %v191, %v190
    %v195 = vpack.c.bf16 %v193, %v192
    %v198 = vunpack.c.l.b16 %v194
    %v199 = vunpack.c.h.b16 %v194
    %v200 = vunpack.c.l.b16 %v195
    %v201 = vunpack.c.h.b16 %v195
    %v202 = vpack.c.b16 %v198, %v198
    %v203 = vpack.c.b16 %v199, %v199
    %v204 = vpack.c.b16 %v200, %v200
    %v205 = vpack.c.b16 %v201, %v201
    %s210 = scalar_lea.vmem [#allocation7], 8
    %211 = vst [vmem:[%s210] sm:$0xf] %v202
    %212 = vst [vmem:[%s210 + $0x4] sm:$0xf] %v203
    %213 = vst [vmem:[%s210 + $0x18] sm:$0xf] %v204
    %214 = vst [vmem:[%s210 + $0x1c] sm:$0xf] %v205
    %s215 = sld [smem:[#allocation2 + $0x100]]
    %v216 = vstv %s215
    %v217 = vmul.f32 %v216, %v96
    %v218 = vmul.f32 %v216, %v97
    %v219 = vmul.f32 %v216, %v98
    %v220 = vmul.f32 %v216, %v99
    %s221 = sld [smem:[#allocation2 + $0x101]]
    %v222 = vstv %s221
    %v223 = vmul.f32 %v222, %v101
    %v224 = vmul.f32 %v222, %v102
    %v225 = vmul.f32 %v222, %v103
    %v226 = vmul.f32 %v222, %v104
    %v227 = vadd.f32 %v217, %v223
    %v228 = vadd.f32 %v218, %v224
    %v229 = vadd.f32 %v219, %v225
    %v230 = vadd.f32 %v220, %v226
    %s231 = sld [smem:[#allocation2 + $0x102]]
    %v232 = vstv %s231
    %v233 = vmul.f32 %v232, %v106
    %v234 = vmul.f32 %v232, %v107
    %v235 = vmul.f32 %v232, %v108
    %v236 = vmul.f32 %v232, %v109
    %v237 = vadd.f32 %v227, %v233
    %v238 = vadd.f32 %v228, %v234
    %v239 = vadd.f32 %v229, %v235
    %v240 = vadd.f32 %v230, %v236
    %s241 = sld [smem:[#allocation6 + $0x2]]
    %v242 = vstv %s241
    %v243 = vadd.f32 %v237, %v242
    %v244 = vadd.f32 %v238, %v242
    %v245 = vadd.f32 %v239, %v242
    %v246 = vadd.f32 %v240, %v242
    %v247 = vpack.c.bf16 %v244, %v243
    %v248 = vpack.c.bf16 %v246, %v245
    %v251 = vunpack.c.l.b16 %v247
    %v252 = vunpack.c.h.b16 %v247
    %v253 = vunpack.c.l.b16 %v248
    %v254 = vunpack.c.h.b16 %v248
    %v255 = vpack.c.b16 %v251, %v251
    %v256 = vpack.c.b16 %v252, %v252
    %v257 = vpack.c.b16 %v253, %v253
    %v258 = vpack.c.b16 %v254, %v254
    %s263 = scalar_lea.vmem [#allocation7], 16
    %264 = vst [vmem:[%s263] sm:$0xf] %v255
    %265 = vst [vmem:[%s263 + $0x4] sm:$0xf] %v256
    %266 = vst [vmem:[%s263 + $0x18] sm:$0xf] %v257
    %267 = vst [vmem:[%s263 + $0x1c] sm:$0xf] %v258
    // Predicated region
    $region22: #{preprocess_conv_layer_forward.2} parent=1 // pred_check
      _
    $region23: #{preprocess_conv_layer_forward.2} parent=1 // pred_check_branch
      %269 = sbr.rel (0) target = $region25
    $region24: #{preprocess_conv_layer_forward.2} parent=1 // pred_region
      %s271 = ssub.s32 768, 768
      %272 = vsyncadd [#allocation3], %s271
      %s273 = sshll.u32 [#allocation7], 4
      %s274 = int_to_ptr.vmem [resolvable:$true] %s273
      %279 = dma.vmem_to_hbm [thread:$0]  %s274, 768, %s3, [#allocation3], 64, 64, 4
    $region25: #{preprocess_conv_layer_forward.2} parent=1 // pred_fallthru
      _
    // Predicated region
    $region26: #{preprocess_conv_layer_forward.2} parent=1 // pred_check
      _
    $region27: #{preprocess_conv_layer_forward.2} parent=1 // pred_check_branch
      %281 = sbr.rel (0) target = $region29
    $region28: #{preprocess_conv_layer_forward.2} parent=1 // pred_region
      %282 = dma.done [#allocation3], 768
    $region29: #{preprocess_conv_layer_forward.2} parent=1 // pred_fallthru
      _
    %283 = vsyncpa [#allocation3], 1
    %284 = vsyncpa [#allocation4], 1
    %285 = vsyncpa [#allocation5], 1

</llo_original>
